<compile_context>
chip_gen: v6e
topology: v6e:2x2x1
jax: 0.10.0
libtpu: 0.0.40
codegen_flags: <defaults>
</compile_context>

<pallas_src>
import functools

import jax
import jax.numpy as jnp
from jax.experimental import pallas as pl
from jax.experimental.pallas import tpu as pltpu


def actor_critic_kernel(xt_ref, w1t_ref, b1t_ref, w2t_ref, b2t_ref, out_ref):
    """Fused two-layer MLP (both heads) in transposed, lane-dense layout.

    Shapes per grid step (tb = batch tile):
      xt  : [in_dim,        tb]  bf16
      w1t : [2*hidden,  in_dim]  bf16   (resident)
      b1t : [2*hidden,       1]  f32    (resident)
      w2t : [out_w,   2*hidden]  bf16   (resident, block-diagonal)
      b2t : [out_w,          1]  f32    (resident)
      out : [out_w,         tb]  f32
    """
    xt = xt_ref[...]

    # Layer 1 (both heads fused along M): f32 accumulation, f32 bias + ReLU.
    h = jnp.dot(w1t_ref[...], xt, preferred_element_type=jnp.float32)
    h = jnp.maximum(h + b1t_ref[...], 0.0)                  # [2*hidden, tb] f32

    # Layer 2 (block-diagonal). At large hidden/action ratios this could be
    # split into two dots on h[:hidden]/h[hidden:] to avoid the zero block
    # doubling K; at these head widths the extra MXU work is negligible.
    out = jnp.dot(w2t_ref[...], h.astype(w2t_ref.dtype),
                  preferred_element_type=jnp.float32) + b2t_ref[...]
    out_ref[...] = out.astype(out_ref.dtype)


def pack_params(params, compute_dtype=jnp.bfloat16):
    """Host-side packing of the 8 per-head tensors into 4 fused, transposed tensors."""
    aw1, ab1, aw2, ab2, cw1, cb1, cw2, cb2 = params
    hidden = aw1.shape[1]
    action_dim = aw2.shape[1]

    # Layer 1, transposed: [2*hidden, in_dim] (bf16) + bias [2*hidden, 1] (f32).
    w1t = jnp.concatenate([aw1, cw1], axis=1).T.astype(compute_dtype)
    b1t = jnp.concatenate([ab1, cb1], axis=1).T.astype(jnp.float32)

    # Layer 2, block-diagonal, transposed: [action_dim+1, 2*hidden] (bf16).
    w2 = jnp.zeros((2 * hidden, action_dim + 1), jnp.float32)
    w2 = w2.at[:hidden, :action_dim].set(aw2.astype(jnp.float32))
    w2 = w2.at[hidden:, action_dim:].set(cw2.astype(jnp.float32))
    w2t = w2.T.astype(compute_dtype)
    b2t = jnp.concatenate([ab2, cb2], axis=1).T.astype(jnp.float32)
    return w1t, b1t, w2t, b2t


def _choose_batch_tile(batch, tile_b):
    """Batch tile: whole batch when small; otherwise >=4 grid steps (v7x: >=2
    per TensorCore for pipelining) with big, 128-aligned lane-dense tiles."""
    if batch <= 512:
        return batch
    tb = min(tile_b, batch // 4)
    return max((tb // 128) * 128, 128)


@functools.partial(jax.jit, static_argnames=("action_dim", "tile_b"))
def actor_critic_forward(state, packed, *, action_dim, tile_b=2048):
    """Single pallas_call over a batch grid; packed weights stay VMEM-resident."""
    w1t, b1t, w2t, b2t = packed
    B, in_dim = state.shape
    out_w = action_dim + 1
    two_hidden = w1t.shape[0]

    # Batch-on-lanes layout: x.T is [in_dim, B] (lane-dense on batch), bf16.
    xt = state.T.astype(w1t.dtype)

    tb = _choose_batch_tile(B, tile_b)
    grid = (pl.cdiv(B, tb),)

    # Resident (constant index_map) refs: single-buffered — they never change
    # per grid step, so double-buffering would only waste VMEM (v7x: 64 MiB).
    def resident(a):
        return pl.BlockSpec(a.shape, lambda i: (0, 0),
                            pipeline_mode=pl.Buffered(1))

    itemsize = lambda a: a.dtype.itemsize
    resident_bytes = sum(a.size * itemsize(a) for a in (w1t, b1t, w2t, b2t))
    stream_bytes = 2 * (in_dim * tb * itemsize(xt) + out_w * tb * 4)  # dbl-buffered
    vmem_limit = int(min(max(2 * (resident_bytes + stream_bytes), 8 << 20), 48 << 20))

    cost = pl.CostEstimate(
        flops=2 * B * in_dim * two_hidden + 2 * B * two_hidden * out_w,
        transcendentals=0,
        bytes_accessed=int(xt.size * itemsize(xt) + resident_bytes + out_w * B * 4),
    )

    out_t = pl.pallas_call(
        actor_critic_kernel,
        out_shape=jax.ShapeDtypeStruct((out_w, B), jnp.float32),
        grid=grid,
        in_specs=[
            pl.BlockSpec((in_dim, tb), lambda i: (0, i)),   # x.T tile (pipelined)
            resident(w1t), resident(b1t),                   # weights resident
            resident(w2t), resident(b2t),
        ],
        out_specs=pl.BlockSpec((out_w, tb), lambda i: (0, i)),
        compiler_params=pltpu.CompilerParams(
            dimension_semantics=("parallel",),              # v7x: shard over 2 TCs
            vmem_limit_bytes=vmem_limit,
        ),
        cost_estimate=cost,
    )(xt, w1t, b1t, w2t, b2t)

    # Lazy split inside the same jit: XLA fuses the transpose + slices.
    out = out_t.T.astype(state.dtype)                       # [B, action_dim + 1]
    return out[:, :action_dim], out[:, action_dim:]


def init_params(key, in_dim, hidden_dim, action_dim, dtype=jnp.float32):
    """Deterministic synthetic parameters (no checkpoint loading)."""
    ks = jax.random.split(key, 8)
    scale = 0.1
    aw1 = scale * jax.random.normal(ks[0], (in_dim, hidden_dim), dtype)
    ab1 = scale * jax.random.normal(ks[1], (1, hidden_dim), dtype)
    aw2 = scale * jax.random.normal(ks[2], (hidden_dim, action_dim), dtype)
    ab2 = scale * jax.random.normal(ks[3], (1, action_dim), dtype)
    cw1 = scale * jax.random.normal(ks[4], (in_dim, hidden_dim), dtype)
    cb1 = scale * jax.random.normal(ks[5], (1, hidden_dim), dtype)
    cw2 = scale * jax.random.normal(ks[6], (hidden_dim, 1), dtype)
    cb2 = scale * jax.random.normal(ks[7], (1, 1), dtype)
    return (aw1, ab1, aw2, ab2, cw1, cb1, cw2, cb2)


def reference_forward(state, params):
    """Pure-JAX f32 reference (unfused, per-head) for correctness check."""
    aw1, ab1, aw2, ab2, cw1, cb1, cw2, cb2 = params
    h_a = jnp.maximum(state @ aw1 + ab1, 0.0)
    act = h_a @ aw2 + ab2
    h_c = jnp.maximum(state @ cw1 + cb1, 0.0)
    val = h_c @ cw2 + cb2
    return act, val


if __name__ == "__main__":
    in_dim, hidden_dim, action_dim = 16, 32, 4

    key = jax.random.PRNGKey(0)
    k_state, k_params, k_big = jax.random.split(key, 3)
    params = init_params(k_params, in_dim, hidden_dim, action_dim)
    packed = pack_params(params)          # bf16 weights, f32 biases

    # bf16 streaming -> loosened tolerances vs. the f32 reference.
    atol = rtol = 3e-2

    # ---- small case (matches the reference module's toy shapes) ----
    batch = 2
    state = jax.random.normal(k_state, (batch, in_dim), jnp.float32)
    action_pred, value_pred = actor_critic_forward(
        state, packed, action_dim=action_dim)
    jax.block_until_ready((action_pred, value_pred))

    ref_act, ref_val = reference_forward(state, params)
    assert action_pred.shape == (batch, action_dim)
    assert value_pred.shape == (batch, 1)
    assert jnp.allclose(action_pred, ref_act, atol=atol, rtol=rtol)
    assert jnp.allclose(value_pred, ref_val, atol=atol, rtol=rtol)

    # ---- larger RL-rollout-sized batch: exercises the batch grid (4 steps) ----
    big_batch = 1024
    big_state = jax.random.normal(k_big, (big_batch, in_dim), jnp.float32)
    big_act, big_val = actor_critic_forward(
        big_state, packed, action_dim=action_dim)
    jax.block_until_ready((big_act, big_val))

    ref_act_b, ref_val_b = reference_forward(big_state, params)
    assert big_act.shape == (big_batch, action_dim)
    assert big_val.shape == (big_batch, 1)
    assert jnp.allclose(big_act, ref_act_b, atol=atol, rtol=rtol)
    assert jnp.allclose(big_val, ref_val_b, atol=atol, rtol=rtol)

    print("KERNEL_OK")
</pallas_src>

<mosaic_0001>
module attributes {stable_mosaic.version = 11 : i64} {
  func.func @actor_critic_kernel(%arg0: i32, %arg1: memref<16x2xbf16, #tpu.memory_space<vmem>>, %arg2: memref<64x16xbf16, #tpu.memory_space<vmem>>, %arg3: memref<64x1xf32, #tpu.memory_space<vmem>>, %arg4: memref<5x64xbf16, #tpu.memory_space<vmem>>, %arg5: memref<5x1xf32, #tpu.memory_space<vmem>>, %arg6: memref<5x2xf32, #tpu.memory_space<vmem>>) attributes {dimension_semantics = [#tpu.dimension_semantics<parallel>], iteration_bounds = array<i64: 1>, scalar_prefetch = 0 : i64, scratch_operands = 0 : i64, tpu.core_type = #tpu.core_type<tc>, window_params = [{transform_indices = @transform_0, window_bounds = array<i64: 16, 2>}, {pipeline_mode = #tpu.pipeline_mode<synchronous>, transform_indices = @transform_1, window_bounds = array<i64: 64, 16>}, {pipeline_mode = #tpu.pipeline_mode<synchronous>, transform_indices = @transform_2, window_bounds = array<i64: 64, 1>}, {pipeline_mode = #tpu.pipeline_mode<synchronous>, transform_indices = @transform_3, window_bounds = array<i64: 5, 64>}, {pipeline_mode = #tpu.pipeline_mode<synchronous>, transform_indices = @transform_4, window_bounds = array<i64: 5, 1>}, {transform_indices = @transform_5, window_bounds = array<i64: 5, 2>}]} {
    %c0 = arith.constant 0 : index
    %c0_0 = arith.constant 0 : index
    %0 = vector.load %arg1[%c0, %c0_0] : memref<16x2xbf16, #tpu.memory_space<vmem>>, vector<16x2xbf16>
    %c0_1 = arith.constant 0 : index
    %c0_2 = arith.constant 0 : index
    %1 = vector.load %arg2[%c0_1, %c0_2] : memref<64x16xbf16, #tpu.memory_space<vmem>>, vector<64x16xbf16>
    %cst = arith.constant dense<0.000000e+00> : vector<64x2xf32>
    %2 = tpu.matmul %1, %0, %cst {dimension_numbers = #tpu.dot_dimension_numbers<[1], [0], [0], [1], [0, 0, 1, 1], [], []>} : vector<64x16xbf16>, vector<16x2xbf16>, vector<64x2xf32> -> vector<64x2xf32>
    %c0_3 = arith.constant 0 : index
    %c0_4 = arith.constant 0 : index
    %3 = vector.load %arg3[%c0_3, %c0_4] : memref<64x1xf32, #tpu.memory_space<vmem>>, vector<64x1xf32>
    %4 = vector.broadcast %3 : vector<64x1xf32> to vector<64x2xf32>
    %5 = arith.addf %2, %4 : vector<64x2xf32>
    %cst_5 = arith.constant 0.000000e+00 : f32
    %6 = vector.broadcast %cst_5 : f32 to vector<64x2xf32>
    %7 = arith.maximumf %5, %6 : vector<64x2xf32>
    %c0_6 = arith.constant 0 : index
    %c0_7 = arith.constant 0 : index
    %8 = vector.load %arg4[%c0_6, %c0_7] : memref<5x64xbf16, #tpu.memory_space<vmem>>, vector<5x64xbf16>
    %9 = arith.truncf %7 : vector<64x2xf32> to vector<64x2xbf16>
    %cst_8 = arith.constant dense<0.000000e+00> : vector<5x2xf32>
    %10 = tpu.matmul %8, %9, %cst_8 {dimension_numbers = #tpu.dot_dimension_numbers<[1], [0], [0], [1], [0, 0, 1, 1], [], []>} : vector<5x64xbf16>, vector<64x2xbf16>, vector<5x2xf32> -> vector<5x2xf32>
    %c0_9 = arith.constant 0 : index
    %c0_10 = arith.constant 0 : index
    %11 = vector.load %arg5[%c0_9, %c0_10] : memref<5x1xf32, #tpu.memory_space<vmem>>, vector<5x1xf32>
    %12 = vector.broadcast %11 : vector<5x1xf32> to vector<5x2xf32>
    %13 = arith.addf %10, %12 : vector<5x2xf32>
    %c0_11 = arith.constant 0 : index
    %c0_12 = arith.constant 0 : index
    %14 = vector.load %arg6[%c0_11, %c0_12] : memref<5x2xf32, #tpu.memory_space<vmem>>, vector<5x2xf32>
    tpu.vector_store %arg6[%c0_11, %c0_12], %13 {strides = array<i32>} : memref<5x2xf32, #tpu.memory_space<vmem>>, vector<5x2xf32>,
    return
  }
  func.func @transform_0(%arg0: i32) -> (i32, i32) {
    %c0_i32 = arith.constant 0 : i32
    %c0_i32_0 = arith.constant 0 : i32
    return %c0_i32, %arg0 : i32, i32
  }
  func.func @transform_1(%arg0: i32) -> (i32, i32) {
    %c0_i32 = arith.constant 0 : i32
    %c0_i32_0 = arith.constant 0 : i32
    %c0_i32_1 = arith.constant 0 : i32
    return %c0_i32, %c0_i32_0 : i32, i32
  }
  func.func @transform_2(%arg0: i32) -> (i32, i32) {
    %c0_i32 = arith.constant 0 : i32
    %c0_i32_0 = arith.constant 0 : i32
    %c0_i32_1 = arith.constant 0 : i32
    return %c0_i32, %c0_i32_0 : i32, i32
  }
  func.func @transform_3(%arg0: i32) -> (i32, i32) {
    %c0_i32 = arith.constant 0 : i32
    %c0_i32_0 = arith.constant 0 : i32
    %c0_i32_1 = arith.constant 0 : i32
    return %c0_i32, %c0_i32_0 : i32, i32
  }
  func.func @transform_4(%arg0: i32) -> (i32, i32) {
    %c0_i32 = arith.constant 0 : i32
    %c0_i32_0 = arith.constant 0 : i32
    %c0_i32_1 = arith.constant 0 : i32
    return %c0_i32, %c0_i32_0 : i32, i32
  }
  func.func @transform_5(%arg0: i32) -> (i32, i32) {
    %c0_i32 = arith.constant 0 : i32
    %c0_i32_0 = arith.constant 0 : i32
    return %c0_i32, %arg0 : i32, i32
  }
}

</mosaic_0001>

<llo_original>
// kernel: actor_critic_forward.1
$region0: #{actor_critic_forward.1}
  #allocation0 [shape = 'u32[]', space=smem, size = 0x4, offset = 0x4, fixed_abs, tag = 'smem constant byte address 0x4 - core index']
  #allocation1 [shape = 'u32[144,128]{1,0:T(1,128)}', space=vmem, size = 0x12000, scoped, tag = 'internal scratch']
  %s0 = inlined_call_operand.vmem [shape: bf16[16,2], index: 0, kind: input, shape index: {}]
  %s1 = inlined_call_operand.vmem [shape: bf16[64,16], index: 1, kind: input, shape index: {}]
  %s2 = inlined_call_operand.vmem [shape: f32[64,1], index: 2, kind: input, shape index: {}]
  %s3 = inlined_call_operand.vmem [shape: bf16[5,64], index: 3, kind: input, shape index: {}]
  %s4 = inlined_call_operand.vmem [shape: f32[5,1], index: 4, kind: input, shape index: {}]
  %s5 = inlined_call_operand.vmem [shape: f32[5,2], index: 5, kind: output, shape index: {}]
  %s6 = sld [smem:[#allocation0]]
  $region30: #{actor_critic_forward.1} parent=0
    _
  %s8 = ssub.s32 1, %s6
  %s9 = scalar_select 0, %s8, %s6
  // Predicated region
  $region2: #{actor_critic_forward.1} parent=0 // pred_check
    _
  $region3: #{actor_critic_forward.1} parent=0 // pred_check_branch
    %11 = sbr.rel (0) target = $region5
  $region4: #{actor_critic_forward.1} parent=0 // pred_region
    _
  $region5: #{actor_critic_forward.1} parent=0 // pred_fallthru
    _
  // Predicated region
  $region6: #{actor_critic_forward.1} parent=0 // pred_check
    _
  $region7: #{actor_critic_forward.1} parent=0 // pred_check_branch
    %13 = sbr.rel (0) target = $region9
  $region8: #{actor_critic_forward.1} parent=0 // pred_region
    _
  $region9: #{actor_critic_forward.1} parent=0 // pred_fallthru
    _
  // Predicated region
  $region10: #{actor_critic_forward.1} parent=0 // pred_check
    _
  $region11: #{actor_critic_forward.1} parent=0 // pred_check_branch
    %15 = sbr.rel (0) target = $region13
  $region12: #{actor_critic_forward.1} parent=0 // pred_region
    _
  $region13: #{actor_critic_forward.1} parent=0 // pred_fallthru
    _
  // Predicated region
  $region14: #{actor_critic_forward.1} parent=0 // pred_check
    _
  $region15: #{actor_critic_forward.1} parent=0 // pred_check_branch
    %17 = sbr.rel (0) target = $region17
  $region16: #{actor_critic_forward.1} parent=0 // pred_region
    _
  $region17: #{actor_critic_forward.1} parent=0 // pred_fallthru
    _
  // Predicated region
  $region18: #{actor_critic_forward.1} parent=0 // pred_check
    _
  $region19: #{actor_critic_forward.1} parent=0 // pred_check_branch
    %19 = sbr.rel (0) target = $region21
  $region20: #{actor_critic_forward.1} parent=0 // pred_region
    _
  $region21: #{actor_critic_forward.1} parent=0 // pred_fallthru
    _
  %v21 = vld [vmem:[%s0] sm:$0xf]
  %v22 = vld [vmem:[%s0 + $0x4] sm:$0xf]
  %v23 = vld [vmem:[%s1] sm:$0xf]
  %v24 = vld [vmem:[%s1 + $0x4] sm:$0xf]
  %v25 = vld [vmem:[%s1 + $0x8] sm:$0xf]
  %v26 = vld [vmem:[%s1 + $0xc] sm:$0xf]
  %v27 = vld [vmem:[%s1 + $0x10] sm:$0xf]
  %v28 = vld [vmem:[%s1 + $0x14] sm:$0xf]
  %v29 = vld [vmem:[%s1 + $0x18] sm:$0xf]
  %v30 = vld [vmem:[%s1 + $0x1c] sm:$0xf]
  %v31 = vld [vmem:[%s2] sm:$0xff]
  %v32 = vld [vmem:[%s2 + $0x8] sm:$0xff]
  %v33 = vld [vmem:[%s2 + $0x10] sm:$0xff]
  %v34 = vld [vmem:[%s2 + $0x18] sm:$0xff]
  %v35 = vld [vmem:[%s2 + $0x20] sm:$0xff]
  %v36 = vld [vmem:[%s2 + $0x28] sm:$0xff]
  %v37 = vld [vmem:[%s2 + $0x30] sm:$0xff]
  %v38 = vld [vmem:[%s2 + $0x38] sm:$0xff]
  %40 = vset.pattern.permute.xlu0 0
  %41 = vperm.xlu0 %40, %v31
  %v42 = vpop.permute.xlu0 %41
  %45 = vset.pattern.permute.xlu0 0
  %46 = vperm.xlu0 %45, %v32
  %v47 = vpop.permute.xlu0 %46
  %50 = vset.pattern.permute.xlu0 0
  %51 = vperm.xlu0 %50, %v33
  %v52 = vpop.permute.xlu0 %51
  %55 = vset.pattern.permute.xlu0 0
  %56 = vperm.xlu0 %55, %v34
  %v57 = vpop.permute.xlu0 %56
  %60 = vset.pattern.permute.xlu0 0
  %61 = vperm.xlu0 %60, %v35
  %v62 = vpop.permute.xlu0 %61
  %65 = vset.pattern.permute.xlu0 0
  %66 = vperm.xlu0 %65, %v36
  %v67 = vpop.permute.xlu0 %66
  %70 = vset.pattern.permute.xlu0 0
  %71 = vperm.xlu0 %70, %v37
  %v72 = vpop.permute.xlu0 %71
  %75 = vset.pattern.permute.xlu0 0
  %76 = vperm.xlu0 %75, %v38
  %v77 = vpop.permute.xlu0 %76
  %v87 = vunpack.c.l.b16 %v23
  %v88 = vunpack.c.l.b16 %v24
  %v89 = vunpack.c.l.b16 %v25
  %v90 = vunpack.c.l.b16 %v26
  %v91 = vunpack.c.l.b16 %v27
  %v92 = vunpack.c.l.b16 %v28
  %v93 = vunpack.c.l.b16 %v29
  %v94 = vunpack.c.l.b16 %v30
  %v95 = vpack.c.b16 %v88, %v87
  %v96 = vpack.c.b16 %v90, %v89
  %v97 = vpack.c.b16 %v92, %v91
  %v98 = vpack.c.b16 %v94, %v93
  %v101 = vunpack.c.l.b16 %v21
  %v102 = vunpack.c.l.b16 %v22
  %v103 = vpack.c.b16 %v102, %v101
  %vm105 = vcmask 130048
  %v107 = vsel %vm105, %v95, 0
  %v110 = vsel %vm105, %v96, 0
  %v113 = vsel %vm105, %v97, 0
  %v116 = vsel %vm105, %v98, 0
  %118 = vmatprep.subr.bf16.mxu0 0
  %119 = vmatpush1.bf16.msra.mxu0 0
  %120 = vmatprep.subr.bf16.mxu0 0
  %121 = vmatpush1.bf16.msra.mxu0 0
  %122 = vmatprep.subr.bf16.mxu0 0
  %123 = vmatpush1.bf16.msra.mxu0 0
  %124 = vmatprep.subr.bf16.mxu0 0
  %125 = vmatpush1.bf16.msra.mxu0 0
  %126 = vmatprep.subr.bf16.mxu0 0
  %127 = vmatpush1.bf16.msra.mxu0 0
  %128 = vmatprep.subr.bf16.mxu0 0
  %129 = vmatpush1.bf16.msra.mxu0 0
  %130 = vmatprep.subr.bf16.mxu0 0
  %131 = vmatpush1.bf16.msra.mxu0 0
  %132 = vmatprep.subr.bf16.mxu0 0
  %133 = vmatpush1.bf16.msra.mxu0 %v103
  %134 = vmatprep.subr.bf16.mxu0 0
  %135 = vmatpush2.bf16.msra.mxu0 0
  %136 = vmatprep.subr.bf16.mxu0 0
  %137 = vmatpush2.bf16.msra.mxu0 0
  %138 = vmatprep.subr.bf16.mxu0 0
  %139 = vmatpush2.bf16.msra.mxu0 0
  %140 = vmatprep.subr.bf16.mxu0 0
  %141 = vmatpush2.bf16.msra.mxu0 0
  %142 = vmatprep.subr.bf16.mxu0 0
  %143 = vmatpush2.bf16.msra.mxu0 0
  %144 = vmatprep.subr.bf16.mxu0 0
  %145 = vmatpush2.bf16.msra.mxu0 0
  %146 = vmatprep.subr.bf16.mxu0 0
  %147 = vmatpush2.bf16.msra.mxu0 0
  %148 = vmatprep.subr.bf16.mxu0 0
  %149 = vmatpush2.bf16.msra.mxu0 0
  %150 = vmatprep.mubr.bf16.mxu0 0
  %151 = vmatmul.mubr.bf16.gmra.mxu0 %v107
  %v152 = vpop.f32.mrf.mxu0
  %v153 = vadd.f32 %v42, %v152
  %v154 = vpop.f32.mrf.mxu0
  %v155 = vpop.f32.mrf.mxu0
  %v156 = vadd.f32 %v47, %v155
  %v157 = vpop.f32.mrf.mxu0
  %158 = vmatprep.mubr.bf16.mxu0 0
  %159 = vmatmul.mubr.bf16.gmra.mxu0 %v110
  %v160 = vpop.f32.mrf.mxu0
  %v161 = vadd.f32 %v52, %v160
  %v162 = vpop.f32.mrf.mxu0
  %v163 = vpop.f32.mrf.mxu0
  %v164 = vadd.f32 %v57, %v163
  %v165 = vpop.f32.mrf.mxu0
  %166 = vmatprep.mubr.bf16.mxu0 0
  %167 = vmatmul.mubr.bf16.gmra.mxu0 %v113
  %v168 = vpop.f32.mrf.mxu0
  %v169 = vadd.f32 %v62, %v168
  %v170 = vpop.f32.mrf.mxu0
  %v171 = vpop.f32.mrf.mxu0
  %v172 = vadd.f32 %v67, %v171
  %v173 = vpop.f32.mrf.mxu0
  %174 = vmatprep.mubr.bf16.mxu0 0
  %175 = vmatmul.mubr.bf16.gmra.mxu0 %v116
  %v176 = vpop.f32.mrf.mxu0
  %v177 = vadd.f32 %v72, %v176
  %v178 = vpop.f32.mrf.mxu0
  %v179 = vpop.f32.mrf.mxu0
  %v180 = vadd.f32 %v77, %v179
  %v181 = vpop.f32.mrf.mxu0
  %182 = vdwg.mxu0
  %v183 = vmax.f32 %v153, 0.0
  %v184 = vmax.f32 %v156, 0.0
  %v185 = vmax.f32 %v161, 0.0
  %v186 = vmax.f32 %v164, 0.0
  %v187 = vmax.f32 %v169, 0.0
  %v188 = vmax.f32 %v172, 0.0
  %v189 = vmax.f32 %v177, 0.0
  %v190 = vmax.f32 %v180, 0.0
  %v191 = vld [vmem:[%s3] sm:$0x7]
  %v192 = vpack.c.bf16 %v184, %v183
  %v193 = vpack.c.bf16 %v186, %v185
  %v194 = vpack.c.bf16 %v188, %v187
  %v195 = vpack.c.bf16 %v190, %v189
  %v196 = vld [vmem:[%s4] sm:$0x1f]
  %198 = vset.pattern.permute.xlu0 0
  %199 = vperm.xlu0 %198, %v196
  %v200 = vpop.permute.xlu0 %199
  %vm202 = vcmask 523264
  %v204 = vsel %vm202, %v191, 0
  %206 = vmatprep.subr.bf16.mxu0 0
  %207 = vmatpush1.bf16.msra.mxu0 0
  %208 = vmatprep.subr.bf16.mxu0 0
  %209 = vmatpush1.bf16.msra.mxu0 0
  %210 = vmatprep.subr.bf16.mxu0 0
  %211 = vmatpush1.bf16.msra.mxu0 0
  %212 = vmatprep.subr.bf16.mxu0 0
  %213 = vmatpush1.bf16.msra.mxu0 0
  %214 = vmatprep.subr.bf16.mxu0 0
  %215 = vmatpush1.bf16.msra.mxu0 %v195
  %216 = vmatprep.subr.bf16.mxu0 0
  %217 = vmatpush1.bf16.msra.mxu0 %v194
  %218 = vmatprep.subr.bf16.mxu0 0
  %219 = vmatpush1.bf16.msra.mxu0 %v193
  %220 = vmatprep.subr.bf16.mxu0 0
  %221 = vmatpush1.bf16.msra.mxu0 %v192
  %222 = vmatprep.subr.bf16.mxu0 0
  %223 = vmatpush2.bf16.msra.mxu0 0
  %224 = vmatprep.subr.bf16.mxu0 0
  %225 = vmatpush2.bf16.msra.mxu0 0
  %226 = vmatprep.subr.bf16.mxu0 0
  %227 = vmatpush2.bf16.msra.mxu0 0
  %228 = vmatprep.subr.bf16.mxu0 0
  %229 = vmatpush2.bf16.msra.mxu0 0
  %230 = vmatprep.subr.bf16.mxu0 0
  %231 = vmatpush2.bf16.msra.mxu0 0
  %232 = vmatprep.subr.bf16.mxu0 0
  %233 = vmatpush2.bf16.msra.mxu0 0
  %234 = vmatprep.subr.bf16.mxu0 0
  %235 = vmatpush2.bf16.msra.mxu0 0
  %236 = vmatprep.subr.bf16.mxu0 0
  %237 = vmatpush2.bf16.msra.mxu0 0
  %238 = vmatprep.mubr.bf16.mxu0 0
  %239 = vmatmul.mubr.bf16.gmra.mxu0 %v204
  %v240 = vpop.f32.mrf.mxu0
  %v241 = vadd.f32 %v200, %v240
  %v242 = vpop.f32.mrf.mxu0
  %v243 = vpop.f32.mrf.mxu0
  %v244 = vpop.f32.mrf.mxu0
  %245 = vdwg.mxu0
  %vm246 = vcmask 12288
  %247 = vst.msk [vmem:[%s5] sm:$0x1f] %vm246, %v241
  // Predicated region
  $region22: #{actor_critic_forward.1} parent=0 // pred_check
    _
  $region23: #{actor_critic_forward.1} parent=0 // pred_check_branch
    %249 = sbr.rel (0) target = $region25
  $region24: #{actor_critic_forward.1} parent=0 // pred_region
    _
  $region25: #{actor_critic_forward.1} parent=0 // pred_fallthru
    _
  // Predicated region
  $region26: #{actor_critic_forward.1} parent=0 // pred_check
    _
  $region27: #{actor_critic_forward.1} parent=0 // pred_check_branch
    %251 = sbr.rel (0) target = $region29
  $region28: #{actor_critic_forward.1} parent=0 // pred_region
    _
  $region29: #{actor_critic_forward.1} parent=0 // pred_fallthru
    _

</llo_original>
